<compile_context>
chip_gen: v5e
topology: v5e:2x2
jax: 0.10.0
libtpu: 0.0.40
codegen_flags: <defaults>
</compile_context>

<pallas_src>
import jax
import jax.numpy as jnp
from jax.experimental import pallas as pl
from jax.experimental.pallas import tpu as pltpu

LANES = 128
SUBLANES = 8
VMEM_LIMIT_BYTES = 48 * 1024 * 1024   # cap only; actual use = 4 buffers * block


def _pick_block_bytes() -> int:
    # 4 MiB blocks are safe on every generation (v7x: 64 MiB physical VMEM;
    # in+out double-buffered = 16 MiB).  v5e/v6e have 128 MiB physical VMEM,
    # so use 8 MiB there and push the fixed ~0.35 us per-grid-step overhead
    # below ~3% of each step.
    try:
        if pltpu.get_tpu_info().vmem_capacity_bytes >= 96 * 1024 * 1024:
            return 8 * 1024 * 1024
    except Exception:
        pass
    return 4 * 1024 * 1024


TARGET_BLOCK_BYTES = _pick_block_bytes()


def _copy_kernel(x_ref, o_ref):
    # Straight VMEM tile copy — the entire "compute" of a materialized view.
    o_ref[...] = x_ref[...]


def _sublane_mult(itemsize: int) -> int:
    # Native sublane packing: f32 tiles are (8,128), bf16 (16,128), int8 (32,128).
    return SUBLANES * max(1, 4 // itemsize)


def _copy_2d(x2d: jnp.ndarray, *, block_bytes: int = TARGET_BLOCK_BYTES) -> jnp.ndarray:
    """Single-pass tiled copy of a 2-D array, blocked along rows.

    Used for lane-dense slabs (last dim a multiple of 128).  No input
    aliasing: the output is genuinely fresh storage and XLA never needs a
    defensive pre-copy of the (still live) input.
    """
    R, W = x2d.shape
    itemsize = jnp.dtype(x2d.dtype).itemsize
    row_mult = _sublane_mult(itemsize)
    padded_w = pl.cdiv(W, LANES) * LANES               # VMEM lane padding
    target_rows = max(1, block_bytes // (padded_w * itemsize))

    if target_rows >= R:
        if R >= 2 * row_mult:
            # Keep >= 2 grid steps so the single "parallel" axis can be
            # sharded across v7x's two TensorCores instead of collapsing the
            # whole copy onto one TC.
            block_rows = pl.cdiv((R + 1) // 2, row_mult) * row_mult
        else:
            block_rows = R                             # one full block (tiny input)
    else:
        block_rows = max(row_mult, (target_rows // row_mult) * row_mult)

    grid = (pl.cdiv(R, block_rows),)                   # ragged last block is masked

    return pl.pallas_call(
        _copy_kernel,
        out_shape=jax.ShapeDtypeStruct((R, W), x2d.dtype),
        grid=grid,
        in_specs=[pl.BlockSpec((block_rows, W), lambda i: (i, 0))],
        out_specs=pl.BlockSpec((block_rows, W), lambda i: (i, 0)),
        compiler_params=pltpu.CompilerParams(
            dimension_semantics=("parallel",),
            vmem_limit_bytes=VMEM_LIMIT_BYTES,
        ),
    )(x2d)


def _copy_row(x2d: jnp.ndarray, *, block_bytes: int = TARGET_BLOCK_BYTES) -> jnp.ndarray:
    """Single-pass copy of a (1, n) array, blocked along the lane dimension.

    Handles ANY n (no 128 alignment required) in one kernel: block lane widths
    are multiples of 128 and the ragged last block is masked by Pallas, so
    there is no prefix slice, no padding copy and no concatenate.  The block
    budget accounts for the 8x sublane padding a one-row block pays in VMEM.
    """
    _, n = x2d.shape
    itemsize = jnp.dtype(x2d.dtype).itemsize
    max_lanes = max(LANES, (block_bytes // (SUBLANES * itemsize)) // LANES * LANES)
    block_lanes = n if n <= max_lanes else max_lanes   # n<=max: full block (exempt)
    grid = (pl.cdiv(n, block_lanes),)

    return pl.pallas_call(
        _copy_kernel,
        out_shape=jax.ShapeDtypeStruct((1, n), x2d.dtype),
        grid=grid,
        in_specs=[pl.BlockSpec((1, block_lanes), lambda i: (0, i))],
        out_specs=pl.BlockSpec((1, block_lanes), lambda i: (0, i)),
        compiler_params=pltpu.CompilerParams(
            dimension_semantics=("parallel",),
            vmem_limit_bytes=VMEM_LIMIT_BYTES,
        ),
    )(x2d)


def _pick_lane_width(n: int):
    """Widest lane-dense width (multiple of 128) that exactly divides n."""
    for w in (8192, 4096, 2048, 1024, 512, 256, 128):
        if n % w == 0:
            return w
    return None


def _pallas_flat_copy(flat: jnp.ndarray, *, block_bytes: int = TARGET_BLOCK_BYTES) -> jnp.ndarray:
    """Copy a 1-D array through Pallas in a single read-N / write-N pass,
    preserving element order, with no extra HBM passes for any size."""
    n = flat.shape[0]
    if n == 0:
        return flat
    w = _pick_lane_width(n)
    if w is not None:
        # Aligned fast path (the common NN case): bitcast reshape to a wide,
        # lane-dense slab; big row blocks; no padding anywhere.
        return _copy_2d(flat.reshape(n // w, w), block_bytes=block_bytes).reshape(-1)
    # Unaligned n (any size): lane-blocked (1, n) view with a masked ragged
    # tail — still one pass, bounded VMEM, no slicing or concatenation.
    return _copy_row(flat.reshape(1, n), block_bytes=block_bytes).reshape(-1)


class View:
    """JAX/Pallas equivalent of the PyTorch View module.

    Default path: metadata-only `jnp.reshape` — exactly what `x.view(shape)`
    does on a contiguous tensor (zero HBM traffic).
    `materialize=True`: route the row-major element stream through the tuned
    Pallas copy kernel (fresh storage), then apply the (free) final reshape.
    """

    def __init__(self, shape, materialize: bool = False):
        self.shape = tuple(shape)
        self.materialize = materialize

    def _resolve_shape(self, n_elems: int):
        # torch.view semantics: at most one -1 dimension is inferred.
        shape = list(self.shape)
        if -1 in shape:
            idx = shape.index(-1)
            known = 1
            for j, s in enumerate(shape):
                if j != idx:
                    known *= int(s)
            shape[idx] = n_elems // known
        total = 1
        for s in shape:
            total *= int(s)
        assert total == n_elems, "View shape incompatible with input size"
        return tuple(shape)

    def __call__(self, x: jnp.ndarray) -> jnp.ndarray:
        shape = self._resolve_shape(x.size)
        if not self.materialize:
            return x.reshape(shape)            # metadata-only, like torch .view
        flat = x.reshape(-1)                   # row-major flatten (bitcast)
        return _pallas_flat_copy(flat).reshape(shape)


if __name__ == "__main__":
    key = jax.random.PRNGKey(0)
    # NCHW input, as a PyTorch conv feature map would be.
    x = jax.random.normal(key, (2, 4, 16, 16), dtype=jnp.float32)
    y_ref = x.reshape(2, -1)   # same semantics as torch .view on contiguous

    # Default path: metadata-only reshape (optimal; matches torch exactly).
    y_view = jax.block_until_ready(View((2, -1))(x))
    assert y_view.shape == (2, 4 * 16 * 16), y_view.shape
    assert bool(jnp.array_equal(y_view, y_ref))

    # Materializing path: aligned fast path of the Pallas copy kernel.
    y_kernel = jax.block_until_ready(View((2, -1), materialize=True)(x))
    assert y_kernel.shape == (2, 4 * 16 * 16), y_kernel.shape
    assert y_kernel.dtype == x.dtype
    assert bool(jnp.array_equal(y_kernel, y_ref))

    # Exercise the multi-block / masked-ragged-block code paths cheaply by
    # shrinking the per-block budget (same kernels, still small inputs).
    small_blk = 64 * 1024
    # Aligned size with several row blocks and a ragged last row block.
    xa = jax.random.normal(key, (19 * 128,), dtype=jnp.float32)
    ya = jax.block_until_ready(_pallas_flat_copy(xa, block_bytes=small_blk))
    assert bool(jnp.array_equal(ya, xa))
    # Unaligned size (not a multiple of 128): lane-blocked path, masked tail.
    xb = jax.random.normal(key, (5000,), dtype=jnp.float32)
    yb = jax.block_until_ready(_pallas_flat_copy(xb, block_bytes=small_blk))
    assert bool(jnp.array_equal(yb, xb))

    print("KERNEL_OK")
</pallas_src>

<mosaic_0001>
module attributes {stable_mosaic.version = 11 : i64} {
  func.func @_copy_kernel(%arg0: i32, %arg1: memref<1x2048xf32, #tpu.memory_space<vmem>>, %arg2: memref<1x2048xf32, #tpu.memory_space<vmem>>) attributes {dimension_semantics = [#tpu.dimension_semantics<parallel>], iteration_bounds = array<i64: 1>, scalar_prefetch = 0 : i64, scratch_operands = 0 : i64, tpu.core_type = #tpu.core_type<tc>, window_params = [{transform_indices = @transform_0, window_bounds = array<i64: 1, 2048>}, {transform_indices = @transform_1, window_bounds = array<i64: 1, 2048>}]} {
    %c0 = arith.constant 0 : index
    %c0_0 = arith.constant 0 : index
    %0 = vector.load %arg1[%c0, %c0_0] : memref<1x2048xf32, #tpu.memory_space<vmem>>, vector<1x2048xf32>
    %c0_1 = arith.constant 0 : index
    %c0_2 = arith.constant 0 : index
    %1 = vector.load %arg2[%c0_1, %c0_2] : memref<1x2048xf32, #tpu.memory_space<vmem>>, vector<1x2048xf32>
    tpu.vector_store %arg2[%c0_1, %c0_2], %0 {strides = array<i32>} : memref<1x2048xf32, #tpu.memory_space<vmem>>, vector<1x2048xf32>,
    return
  }
  func.func @transform_0(%arg0: i32) -> (i32, i32) {
    %c0_i32 = arith.constant 0 : i32
    %c0_i32_0 = arith.constant 0 : i32
    return %arg0, %c0_i32 : i32, i32
  }
  func.func @transform_1(%arg0: i32) -> (i32, i32) {
    %c0_i32 = arith.constant 0 : i32
    %c0_i32_0 = arith.constant 0 : i32
    return %arg0, %c0_i32 : i32, i32
  }
}

</mosaic_0001>

<llo_original>
// kernel: tpu_custom_call.1
$region0: #{tpu_custom_call.1}
  #allocation0 [shape = 'u32[]', space=smem, size = 0x4, offset = 0x4, fixed_abs, tag = 'smem constant byte address 0x4 - core index']
  #allocation1 [shape = 'u32[72,128]{1,0:T(1,128)}', space=vmem, size = 0x9000, scoped, tag = 'internal scratch']
  %s0 = inlined_call_operand.hbm [shape: f32[1,2048], index: 0, kind: input, shape index: {}]
  %s1 = inlined_call_operand.hbm [shape: f32[1,2048], index: 1, kind: output, shape index: {}]
  %s2 = sld [smem:[#allocation0]]
  $region18: #{tpu_custom_call.1} parent=0
    _
  %s4 = ssub.s32 1, %s2
  %s5 = scalar_select 0, %s4, %s2
  $region1: #{tpu_custom_call.1} parent=0
    #allocation2 [shape = 'u8[8192]{0}', space=vmem, size = 0x2000, scoped, tag = 'input window, operand 0, single buffered']
    #allocation3 [shape = 's32[1]{0}', space=sflag, size = 0x4, scoped, tag = 'scoped memory for tpu_custom_call.1']
    #allocation4 [shape = 's32[1]{0}', space=sflag, size = 0x4, scoped, tag = 'scoped memory for tpu_custom_call.1']
    #allocation5 [shape = 'u8[8192]{0}', space=vmem, size = 0x2000, scoped, tag = 'output window, operand 0, single buffered']
    %6 = vsyncpa [#allocation3], 0
    %7 = vsyncpa [#allocation4], 0
    // Predicated region
    $region2: #{tpu_custom_call.1} parent=1 // pred_check
      _
    $region3: #{tpu_custom_call.1} parent=1 // pred_check_branch
      %9 = sbr.rel (0) target = $region5
    $region4: #{tpu_custom_call.1} parent=1 // pred_region
      %11 = vsyncadd [#allocation3], 0
      %s13 = sshll.u32 %s0, 4
      %s14 = int_to_ptr.hbm [resolvable:$true] %s13
      %s15 = sshll.u32 [#allocation2], 4
      %s16 = int_to_ptr.vmem [resolvable:$true] %s15
      %18 = dma.hbm_to_vmem [thread:$0]  %s14, 256, %s16, [#allocation3]
    $region5: #{tpu_custom_call.1} parent=1 // pred_fallthru
      _
    // Predicated region
    $region6: #{tpu_custom_call.1} parent=1 // pred_check
      _
    $region7: #{tpu_custom_call.1} parent=1 // pred_check_branch
      %20 = sbr.rel (0) target = $region9
    $region8: #{tpu_custom_call.1} parent=1 // pred_region
      %22 = dma.done [#allocation3], 256
    $region9: #{tpu_custom_call.1} parent=1 // pred_fallthru
      _
    %v23 = vld [vmem:[#allocation2] sm:$0xff]
    %v24 = vld [vmem:[#allocation2 + $0x8] sm:$0xff]
    %25 = vst [vmem:[#allocation5] sm:$0xff] %v23
    %26 = vst [vmem:[#allocation5 + $0x8] sm:$0xff] %v24
    // Predicated region
    $region10: #{tpu_custom_call.1} parent=1 // pred_check
      _
    $region11: #{tpu_custom_call.1} parent=1 // pred_check_branch
      %28 = sbr.rel (0) target = $region13
    $region12: #{tpu_custom_call.1} parent=1 // pred_region
      %30 = vsyncadd [#allocation4], 0
      %s32 = sshll.u32 [#allocation5], 4
      %s33 = int_to_ptr.vmem [resolvable:$true] %s32
      %s34 = sshll.u32 %s1, 4
      %s35 = int_to_ptr.hbm [resolvable:$true] %s34
      %37 = dma.vmem_to_hbm [thread:$0]  %s33, 256, %s35, [#allocation4]
    $region13: #{tpu_custom_call.1} parent=1 // pred_fallthru
      _
    // Predicated region
    $region14: #{tpu_custom_call.1} parent=1 // pred_check
      _
    $region15: #{tpu_custom_call.1} parent=1 // pred_check_branch
      %39 = sbr.rel (0) target = $region17
    $region16: #{tpu_custom_call.1} parent=1 // pred_region
      %41 = dma.done [#allocation4], 256
    $region17: #{tpu_custom_call.1} parent=1 // pred_fallthru
      _
    %42 = vsyncpa [#allocation3], 1
    %43 = vsyncpa [#allocation4], 1

</llo_original>
